<compile_context>
chip_gen: v5e
topology: v5e:2x2
jax: 0.10.0
libtpu: 0.0.40
codegen_flags: <defaults>
</compile_context>

<pallas_src>
import jax
import jax.numpy as jnp
from jax.experimental import pallas as pl
from jax.experimental.pallas import tpu as pltpu

IN_FEATURES = 148
HIDDEN = 32
OUT_FEATURES = 10
OUT_PAD = 128  # lane-dense output width (real classes live in [:, :10])


def classifier_kernel(x_ref, w1_ref, b1_ref, w2_ref, b2_ref, o_ref):
    # x_ref:  (TB, 148)
    # w1_ref: (148, 32), b1_ref: (1, 32)
    # w2_ref: (32, 128), b2_ref: (1, 128)   (zero-padded beyond column 10)
    # o_ref:  (TB, 128)
    x = x_ref[...]

    # Linear1 + ReLU (MXU + VPU), f32 accumulation
    h = jnp.dot(x, w1_ref[...], preferred_element_type=jnp.float32)
    h = jnp.maximum(h + b1_ref[...], 0.0)

    # Linear2 into a lane-dense (128-wide) output block
    y = jnp.dot(h, w2_ref[...], preferred_element_type=jnp.float32)
    o_ref[...] = (y + b2_ref[...]).astype(o_ref.dtype)


def _round_up(n, m):
    return pl.cdiv(n, m) * m


def classifier_forward(x, w1, b1, w2, b2, *, tb=1024):
    """x: (B, 148) f32.  w1: (148, 32), b1: (1, 32), w2: (32, 10), b2: (1, 10)."""
    B = x.shape[0]

    # Lane-dense output: zero-pad w2 / b2 to 128 output lanes (wrapper-side).
    w2p = jnp.zeros((HIDDEN, OUT_PAD), w2.dtype).at[:, :OUT_FEATURES].set(w2)
    b2p = jnp.zeros((1, OUT_PAD), b2.dtype).at[:, :OUT_FEATURES].set(b2)

    # Pick the batch tile: multiple of 8, no larger than the (rounded-up) batch.
    tb = int(min(tb, _round_up(B, 8)))
    tb = int(_round_up(tb, 8))

    # Pad batch so it divides evenly into tiles.
    b_pad = int(_round_up(B, tb))
    if b_pad != B:
        x = jnp.pad(x, ((0, b_pad - B), (0, 0)))

    grid = (b_pad // tb,)

    out = pl.pallas_call(
        classifier_kernel,
        out_shape=jax.ShapeDtypeStruct((b_pad, OUT_PAD), jnp.float32),
        grid_spec=pl.GridSpec(
            grid=grid,
            in_specs=[
                # x tiles move with the grid index.
                pl.BlockSpec((tb, IN_FEATURES), lambda i: (i, 0)),
                # Weights / biases: constant index_map => VMEM-resident across steps.
                pl.BlockSpec((IN_FEATURES, HIDDEN), lambda i: (0, 0)),
                pl.BlockSpec((1, HIDDEN), lambda i: (0, 0)),
                pl.BlockSpec((HIDDEN, OUT_PAD), lambda i: (0, 0)),
                pl.BlockSpec((1, OUT_PAD), lambda i: (0, 0)),
            ],
            out_specs=pl.BlockSpec((tb, OUT_PAD), lambda i: (i, 0)),
        ),
        compiler_params=pltpu.CompilerParams(
            # Batch tiles are independent -> shard across TensorCores on v7x.
            dimension_semantics=("parallel",),
        ),
    )(x, w1, b1, w2p, b2p)

    # Slice back to real batch / real number of classes.
    return out[:B, :OUT_FEATURES]


def xavier_uniform(key, fan_in, fan_out):
    # Matches nn.init.xavier_uniform_ (gain=1): U(-a, a), a = sqrt(6/(fan_in+fan_out))
    a = jnp.sqrt(6.0 / (fan_in + fan_out))
    # Stored already transposed: (in_features, out_features)
    return jax.random.uniform(key, (fan_in, fan_out), jnp.float32, -a, a)


def init_params(key):
    k1, k2, k3, k4 = jax.random.split(key, 4)
    w1 = xavier_uniform(k1, IN_FEATURES, HIDDEN)
    w2 = xavier_uniform(k2, HIDDEN, OUT_FEATURES)
    # nn.Linear default bias init: U(-1/sqrt(fan_in), 1/sqrt(fan_in))
    bnd1 = 1.0 / jnp.sqrt(float(IN_FEATURES))
    bnd2 = 1.0 / jnp.sqrt(float(HIDDEN))
    b1 = jax.random.uniform(k3, (1, HIDDEN), jnp.float32, -bnd1, bnd1)
    b2 = jax.random.uniform(k4, (1, OUT_FEATURES), jnp.float32, -bnd2, bnd2)
    return w1, b1, w2, b2


def reference_forward(x, w1, b1, w2, b2):
    h = jnp.maximum(x @ w1 + b1, 0.0)
    return h @ w2 + b2


if __name__ == "__main__":
    key = jax.random.PRNGKey(0)
    kx, kp = jax.random.split(key)

    # Batch chosen so that (with tb=128) the grid has 3 steps and the batch
    # padding path (300 -> 384) is exercised, while shapes stay small.
    B = 300
    x = jax.random.normal(kx, (B, IN_FEATURES), jnp.float32)
    w1, b1, w2, b2 = init_params(kp)

    out = classifier_forward(x, w1, b1, w2, b2, tb=128)
    out = jax.block_until_ready(out)

    ref = reference_forward(x, w1, b1, w2, b2)
    assert out.shape == (B, OUT_FEATURES)
    assert jnp.allclose(out, ref, atol=1e-4, rtol=1e-4), "mismatch vs reference"

    print("KERNEL_OK")
</pallas_src>

<mosaic_0001>
module attributes {stable_mosaic.version = 11 : i64} {
  func.func @classifier_kernel(%arg0: i32, %arg1: memref<128x148xf32, #tpu.memory_space<vmem>>, %arg2: memref<148x32xf32, #tpu.memory_space<vmem>>, %arg3: memref<1x32xf32, #tpu.memory_space<vmem>>, %arg4: memref<32x128xf32, #tpu.memory_space<vmem>>, %arg5: memref<1x128xf32, #tpu.memory_space<vmem>>, %arg6: memref<128x128xf32, #tpu.memory_space<vmem>>) attributes {dimension_semantics = [#tpu.dimension_semantics<parallel>], iteration_bounds = array<i64: 3>, scalar_prefetch = 0 : i64, scratch_operands = 0 : i64, tpu.core_type = #tpu.core_type<tc>, window_params = [{transform_indices = @transform_0, window_bounds = array<i64: 128, 148>}, {pipeline_mode = #tpu.pipeline_mode<synchronous>, transform_indices = @transform_1, window_bounds = array<i64: 148, 32>}, {pipeline_mode = #tpu.pipeline_mode<synchronous>, transform_indices = @transform_2, window_bounds = array<i64: 1, 32>}, {pipeline_mode = #tpu.pipeline_mode<synchronous>, transform_indices = @transform_3, window_bounds = array<i64: 32, 128>}, {pipeline_mode = #tpu.pipeline_mode<synchronous>, transform_indices = @transform_4, window_bounds = array<i64: 1, 128>}, {transform_indices = @transform_5, window_bounds = array<i64: 128, 128>}]} {
    %c0 = arith.constant 0 : index
    %c0_0 = arith.constant 0 : index
    %0 = vector.load %arg1[%c0, %c0_0] : memref<128x148xf32, #tpu.memory_space<vmem>>, vector<128x148xf32>
    %c0_1 = arith.constant 0 : index
    %c0_2 = arith.constant 0 : index
    %1 = vector.load %arg2[%c0_1, %c0_2] : memref<148x32xf32, #tpu.memory_space<vmem>>, vector<148x32xf32>
    %cst = arith.constant dense<0.000000e+00> : vector<128x32xf32>
    %2 = tpu.matmul %0, %1, %cst {dimension_numbers = #tpu.dot_dimension_numbers<[1], [0], [0], [1], [0, 0, 1, 1], [], []>} : vector<128x148xf32>, vector<148x32xf32>, vector<128x32xf32> -> vector<128x32xf32>
    %c0_3 = arith.constant 0 : index
    %c0_4 = arith.constant 0 : index
    %3 = vector.load %arg3[%c0_3, %c0_4] : memref<1x32xf32, #tpu.memory_space<vmem>>, vector<1x32xf32>
    %4 = vector.broadcast %3 : vector<1x32xf32> to vector<128x32xf32>
    %5 = arith.addf %2, %4 : vector<128x32xf32>
    %cst_5 = arith.constant 0.000000e+00 : f32
    %6 = vector.broadcast %cst_5 : f32 to vector<128x32xf32>
    %7 = arith.maximumf %5, %6 : vector<128x32xf32>
    %c0_6 = arith.constant 0 : index
    %c0_7 = arith.constant 0 : index
    %8 = vector.load %arg4[%c0_6, %c0_7] : memref<32x128xf32, #tpu.memory_space<vmem>>, vector<32x128xf32>
    %cst_8 = arith.constant dense<0.000000e+00> : vector<128x128xf32>
    %9 = tpu.matmul %7, %8, %cst_8 {dimension_numbers = #tpu.dot_dimension_numbers<[1], [0], [0], [1], [0, 0, 1, 1], [], []>} : vector<128x32xf32>, vector<32x128xf32>, vector<128x128xf32> -> vector<128x128xf32>
    %c0_9 = arith.constant 0 : index
    %c0_10 = arith.constant 0 : index
    %10 = vector.load %arg5[%c0_9, %c0_10] : memref<1x128xf32, #tpu.memory_space<vmem>>, vector<1x128xf32>
    %11 = vector.broadcast %10 : vector<1x128xf32> to vector<128x128xf32>
    %12 = arith.addf %9, %11 : vector<128x128xf32>
    %c0_11 = arith.constant 0 : index
    %c0_12 = arith.constant 0 : index
    %13 = vector.load %arg6[%c0_11, %c0_12] : memref<128x128xf32, #tpu.memory_space<vmem>>, vector<128x128xf32>
    tpu.vector_store %arg6[%c0_11, %c0_12], %12 {strides = array<i32>} : memref<128x128xf32, #tpu.memory_space<vmem>>, vector<128x128xf32>,
    return
  }
  func.func @transform_0(%arg0: i32) -> (i32, i32) {
    %c0_i32 = arith.constant 0 : i32
    %c0_i32_0 = arith.constant 0 : i32
    return %arg0, %c0_i32 : i32, i32
  }
  func.func @transform_1(%arg0: i32) -> (i32, i32) {
    %c0_i32 = arith.constant 0 : i32
    %c0_i32_0 = arith.constant 0 : i32
    %c0_i32_1 = arith.constant 0 : i32
    return %c0_i32, %c0_i32_0 : i32, i32
  }
  func.func @transform_2(%arg0: i32) -> (i32, i32) {
    %c0_i32 = arith.constant 0 : i32
    %c0_i32_0 = arith.constant 0 : i32
    %c0_i32_1 = arith.constant 0 : i32
    return %c0_i32, %c0_i32_0 : i32, i32
  }
  func.func @transform_3(%arg0: i32) -> (i32, i32) {
    %c0_i32 = arith.constant 0 : i32
    %c0_i32_0 = arith.constant 0 : i32
    %c0_i32_1 = arith.constant 0 : i32
    return %c0_i32, %c0_i32_0 : i32, i32
  }
  func.func @transform_4(%arg0: i32) -> (i32, i32) {
    %c0_i32 = arith.constant 0 : i32
    %c0_i32_0 = arith.constant 0 : i32
    %c0_i32_1 = arith.constant 0 : i32
    return %c0_i32, %c0_i32_0 : i32, i32
  }
  func.func @transform_5(%arg0: i32) -> (i32, i32) {
    %c0_i32 = arith.constant 0 : i32
    %c0_i32_0 = arith.constant 0 : i32
    return %arg0, %c0_i32 : i32, i32
  }
}

</mosaic_0001>

<llo_original>
// kernel: tpu_custom_call.1
$region0: #{tpu_custom_call.1}
  #allocation0 [shape = 'u32[]', space=smem, size = 0x4, offset = 0x4, fixed_abs, tag = 'smem constant byte address 0x4 - core index']
  #allocation1 [shape = 'u32[72,128]{1,0:T(1,128)}', space=vmem, size = 0x9000, scoped, tag = 'internal scratch']
  %s0 = inlined_call_operand.vmem [shape: f32[384,148], index: 0, kind: input, shape index: {}]
  %s1 = inlined_call_operand.vmem [shape: f32[148,32], index: 1, kind: input, shape index: {}]
  %s2 = inlined_call_operand.vmem [shape: f32[1,32], index: 2, kind: input, shape index: {}]
  %s3 = inlined_call_operand.vmem [shape: f32[32,128], index: 3, kind: input, shape index: {}]
  %s4 = inlined_call_operand.vmem [shape: f32[1,128], index: 4, kind: input, shape index: {}]
  %s5 = inlined_call_operand.hbm [shape: f32[384,128], index: 5, kind: output, shape index: {}]
  %s6 = sld [smem:[#allocation0]]
  $region53: #{tpu_custom_call.1} parent=0
    _
  %s8 = ssub.s32 1, %s6
  %s9 = scalar_select 0, %s8, %s6
  $region1: #{tpu_custom_call.1} parent=0
    #allocation2 [shape = 'u8[131072]{0}', space=vmem, size = 0x20000, scoped, tag = 'output window, operand 0']
    #allocation3 [shape = 's32[2]{0}', space=sflag, size = 0x8, scoped, tag = 'scoped memory for tpu_custom_call.1']
    %10 = vsyncpa [#allocation3], 0
    %s11 = scalar_lea.sflag [#allocation3], 1
    %12 = vsyncpa %s11, 0
    loop: start=0, step=1, limit=5
    $region2: #{tpu_custom_call.1} parent=1 // loop_pre_header
      _
    $region3: #{tpu_custom_call.1} parent=1 // loop_header
      %s14 = sphi 0, %s18
      %p15 = scmp.ge.s32.totalorder %s14, 5
      %s24 = sphi 0, %s26
      %s27 = sphi 0, %s24
      %s28 = sphi 0, %s27
      %s44 = sphi 0, %s28
      %s48 = sphi 0, %s48
      %s50 = sphi 0, %s48
      %s51 = sphi 0, %s50
      %s65 = sphi 0, %s51
      %s69 = sphi 0, %s69
      %s71 = sphi 0, %s69
      %s72 = sphi 0, %s71
      %s86 = sphi 0, %s72
      %s90 = sphi 0, %s90
      %s92 = sphi 0, %s90
      %s93 = sphi 0, %s92
      %s107 = sphi 0, %s93
      %s111 = sphi 0, %s111
      %s113 = sphi 0, %s111
      %s114 = sphi 0, %s113
      %s128 = sphi 0, %s114
      %s134 = sphi 0, %s136
      %s137 = sphi 0, %s134
      %s138 = sphi 0, %s137
      %s154 = sphi 0, %s138
    $region4: #{tpu_custom_call.1} parent=1 // loop_header_branch
      %17 = sbr.rel (%p15) target = $region8
    $region5: #{tpu_custom_call.1} parent=1 // loop_body
      %s19 = ssub.s32 %s14, 1
      %s20 = ssub.s32 %s14, 2
      %s21 = sadd.s32 %s14, 1
      %s22 = ssub.s32 %s14, %s21
      %p23 = scmp.eq.s32.totalorder %s22, 0
      %s25 = sadd.s32 %s24, 1
      %s26 = scalar_select %p23, %s24, %s25
      %p29 = pneg %p23
      %p30 = scmp.eq.s32.totalorder %s14, 2
      %p31 = por %p29, %p30
      %p32 = scmp.ne.s32.totalorder %s24, %s27
      %p33 = scmp.eq.s32.totalorder %s14, 0
      %p34 = por %p32, %p33
      %p35 = scmp.ne.s32.totalorder %s24, %s27
      %p36 = scmp.eq.s32.totalorder %s19, 2
      %p37 = por %p35, %p36
      %p38 = scmp.ne.s32.totalorder %s27, %s28
      %p39 = scmp.eq.s32.totalorder %s19, 0
      %p40 = por %p38, %p39
      %p41 = scmp.ne.s32.totalorder %s27, %s28
      %p42 = scmp.eq.s32.totalorder %s20, 2
      %p43 = por %p41, %p42
      %p45 = scmp.ne.s32.totalorder %s28, %s44
      %p46 = scmp.eq.s32.totalorder %s20, 0
      %p47 = por %p45, %p46
      %s49 = sadd.s32 %s48, 1
      %p52 = scmp.eq.s32.totalorder %s14, 2
      %p53 = scmp.ne.s32.totalorder %s48, %s50
      %p54 = scmp.eq.s32.totalorder %s14, 0
      %p55 = por %p53, %p54
      %p56 = scmp.ne.s32.totalorder %s48, %s50
      %p57 = scmp.eq.s32.totalorder %s19, 2
      %p58 = por %p56, %p57
      %p59 = scmp.ne.s32.totalorder %s50, %s51
      %p60 = scmp.eq.s32.totalorder %s19, 0
      %p61 = por %p59, %p60
      %p62 = scmp.ne.s32.totalorder %s50, %s51
      %p63 = scmp.eq.s32.totalorder %s20, 2
      %p64 = por %p62, %p63
      %p66 = scmp.ne.s32.totalorder %s51, %s65
      %p67 = scmp.eq.s32.totalorder %s20, 0
      %p68 = por %p66, %p67
      %s70 = sadd.s32 %s69, 1
      %p73 = scmp.eq.s32.totalorder %s14, 2
      %p74 = scmp.ne.s32.totalorder %s69, %s71
      %p75 = scmp.eq.s32.totalorder %s14, 0
      %p76 = por %p74, %p75
      %p77 = scmp.ne.s32.totalorder %s69, %s71
      %p78 = scmp.eq.s32.totalorder %s19, 2
      %p79 = por %p77, %p78
      %p80 = scmp.ne.s32.totalorder %s71, %s72
      %p81 = scmp.eq.s32.totalorder %s19, 0
      %p82 = por %p80, %p81
      %p83 = scmp.ne.s32.totalorder %s71, %s72
      %p84 = scmp.eq.s32.totalorder %s20, 2
      %p85 = por %p83, %p84
      %p87 = scmp.ne.s32.totalorder %s72, %s86
      %p88 = scmp.eq.s32.totalorder %s20, 0
      %p89 = por %p87, %p88
      %s91 = sadd.s32 %s90, 1
      %p94 = scmp.eq.s32.totalorder %s14, 2
      %p95 = scmp.ne.s32.totalorder %s90, %s92
      %p96 = scmp.eq.s32.totalorder %s14, 0
      %p97 = por %p95, %p96
      %p98 = scmp.ne.s32.totalorder %s90, %s92
      %p99 = scmp.eq.s32.totalorder %s19, 2
      %p100 = por %p98, %p99
      %p101 = scmp.ne.s32.totalorder %s92, %s93
      %p102 = scmp.eq.s32.totalorder %s19, 0
      %p103 = por %p101, %p102
      %p104 = scmp.ne.s32.totalorder %s92, %s93
      %p105 = scmp.eq.s32.totalorder %s20, 2
      %p106 = por %p104, %p105
      %p108 = scmp.ne.s32.totalorder %s93, %s107
      %p109 = scmp.eq.s32.totalorder %s20, 0
      %p110 = por %p108, %p109
      %s112 = sadd.s32 %s111, 1
      %p115 = scmp.eq.s32.totalorder %s14, 2
      %p116 = scmp.ne.s32.totalorder %s111, %s113
      %p117 = scmp.eq.s32.totalorder %s14, 0
      %p118 = por %p116, %p117
      %p119 = scmp.ne.s32.totalorder %s111, %s113
      %p120 = scmp.eq.s32.totalorder %s19, 2
      %p121 = por %p119, %p120
      %p122 = scmp.ne.s32.totalorder %s113, %s114
      %p123 = scmp.eq.s32.totalorder %s19, 0
      %p124 = por %p122, %p123
      %p125 = scmp.ne.s32.totalorder %s113, %s114
      %p126 = scmp.eq.s32.totalorder %s20, 2
      %p127 = por %p125, %p126
      %p129 = scmp.ne.s32.totalorder %s114, %s128
      %p130 = scmp.eq.s32.totalorder %s20, 0
      %p131 = por %p129, %p130
      %s132 = ssub.s32 %s14, %s21
      %p133 = scmp.eq.s32.totalorder %s132, 0
      %s135 = sadd.s32 %s134, 1
      %s136 = scalar_select %p133, %s134, %s135
      %p139 = pneg %p133
      %p140 = scmp.eq.s32.totalorder %s14, 2
      %p141 = por %p139, %p140
      %p142 = scmp.ne.s32.totalorder %s134, %s137
      %p143 = scmp.eq.s32.totalorder %s14, 0
      %p144 = por %p142, %p143
      %p145 = scmp.ne.s32.totalorder %s134, %s137
      %p146 = scmp.eq.s32.totalorder %s19, 2
      %p147 = por %p145, %p146
      %p148 = scmp.ne.s32.totalorder %s137, %s138
      %p149 = scmp.eq.s32.totalorder %s19, 0
      %p150 = por %p148, %p149
      %p151 = scmp.ne.s32.totalorder %s137, %s138
      %p152 = scmp.eq.s32.totalorder %s20, 2
      %p153 = por %p151, %p152
      %p155 = scmp.ne.s32.totalorder %s138, %s154
      %p156 = scmp.eq.s32.totalorder %s20, 0
      %p157 = por %p155, %p156
      %p158 = scmp.le.s32.totalorder 1, %s14
      %p159 = scmp.lt.s32.totalorder %s14, 4
      %p160 = pnand %p158, %p159
      %p161 = pneg %p160
      // Predicated region
      $region9: #{tpu_custom_call.1} parent=5 // pred_check
        _
      $region10: #{tpu_custom_call.1} parent=5 // pred_check_branch
        %163 = sbr.rel (%p160) target = $region12
      $region11: #{tpu_custom_call.1} parent=5 // pred_region
        %s164 = ssub.s32 %s14, 1
        // Predicated region
        $region13: #{tpu_custom_call.1} parent=11 // pred_check
          %p165 = pneg %p61
        $region14: #{tpu_custom_call.1} parent=11 // pred_check_branch
          %167 = sbr.rel (%p165) target = $region16
        $region15: #{tpu_custom_call.1} parent=11 // pred_region
          _
        $region16: #{tpu_custom_call.1} parent=11 // pred_fallthru
          _
        // Predicated region
        $region17: #{tpu_custom_call.1} parent=11 // pred_check
          %p168 = pneg %p82
        $region18: #{tpu_custom_call.1} parent=11 // pred_check_branch
          %170 = sbr.rel (%p168) target = $region20
        $region19: #{tpu_custom_call.1} parent=11 // pred_region
          _
        $region20: #{tpu_custom_call.1} parent=11 // pred_fallthru
          _
        // Predicated region
        $region21: #{tpu_custom_call.1} parent=11 // pred_check
          %p171 = pneg %p103
        $region22: #{tpu_custom_call.1} parent=11 // pred_check_branch
          %173 = sbr.rel (%p171) target = $region24
        $region23: #{tpu_custom_call.1} parent=11 // pred_region
          _
        $region24: #{tpu_custom_call.1} parent=11 // pred_fallthru
          _
        // Predicated region
        $region25: #{tpu_custom_call.1} parent=11 // pred_check
          %p174 = pneg %p124
        $region26: #{tpu_custom_call.1} parent=11 // pred_check_branch
          %176 = sbr.rel (%p174) target = $region28
        $region27: #{tpu_custom_call.1} parent=11 // pred_region
          _
        $region28: #{tpu_custom_call.1} parent=11 // pred_fallthru
          _
      $region12: #{tpu_custom_call.1} parent=5 // pred_fallthru
        _
      %p177 = scmp.lt.s32.totalorder %s14, 3
      // Predicated region
      $region29: #{tpu_custom_call.1} parent=5 // pred_check
        %p178 = pneg %p177
      $region30: #{tpu_custom_call.1} parent=5 // pred_check_branch
        %180 = sbr.rel (%p178) target = $region32
      $region31: #{tpu_custom_call.1} parent=5 // pred_region
        // Predicated region
        $region33: #{tpu_custom_call.1} parent=31 // pred_check
          %p181 = pneg %p34
        $region34: #{tpu_custom_call.1} parent=31 // pred_check_branch
          %183 = sbr.rel (%p181) target = $region36
        $region35: #{tpu_custom_call.1} parent=31 // pred_region
          %s184 = smul.u32 16, %s14
          %p185 = scmp.lt.s32.totalorder %s184, 47
          %s186 = scalar_select %p185, %s184, 47
          %s187 = smul.addr %s186, 2
          %s188 = smul.addr %s187, 8
          %s189 = scalar_lea.vmem %s0, %s188
          %s190 = smul.u32 16, %s14
        $region36: #{tpu_custom_call.1} parent=31 // pred_fallthru
          _
      $region32: #{tpu_custom_call.1} parent=5 // pred_fallthru
        _
      %p191 = scmp.le.s32.totalorder 1, %s14
      %p192 = scmp.lt.s32.totalorder %s14, 4
      %p193 = pnand %p191, %p192
      %p194 = pneg %p193
      // Predicated region
      $region37: #{tpu_custom_call.1} parent=5 // pred_check
        _
      $region38: #{tpu_custom_call.1} parent=5 // pred_check_branch
        %196 = sbr.rel (%p193) target = $region40
      $region39: #{tpu_custom_call.1} parent=5 // pred_region
        %s197 = ssub.s32 %s14, 1
        %s198 = smul.u32 16, %s19
        %p199 = scmp.lt.s32.totalorder %s198, 47
        %s200 = scalar_select %p199, %s198, 47
        %s201 = smul.addr %s200, 2
        %s202 = smul.addr %s201, 8
        %s203 = scalar_lea.vmem %s0, %s202
        %p204 = pneg %p40
        %p205 = pneg %p37
        %p206 = pneg %p61
        %p207 = pneg %p58
        %p208 = pneg %p82
        %p209 = pneg %p79
        %p210 = pneg %p103
        %p211 = pneg %p100
        %p212 = pneg %p124
        %p213 = pneg %p121
        %p214 = pneg %p150
        %p215 = pneg %p147
        %s216 = sand.u32 %s137, 1
        %s217 = scalar_lea.sflag [#allocation3], %s216
        %s218 = sand.u32 %s137, 1
        %s219 = smul.addr %s218, 128
        %s220 = scalar_lea.vmem [#allocation2], %s219
        %s221 = smul.u32 16, %s19
        %p222 = scmp.lt.s32.totalorder %s221, 47
        %s223 = scalar_select %p222, %s221, 47
        %s224 = smul.addr %s223, 2
        %s225 = smul.addr %s224, 8
        %s226 = scalar_lea.vmem %s0, %s225
        %s227 = smul.u32 16, %s19
        %s228 = smul.u32 16, %s19
        %v229 = vld [vmem:[%s226] sm:$0xff]
        %v230 = vld [vmem:[%s226 + $0x8] sm:$0xff]
        %v231 = vld [vmem:[%s226 + $0x10] sm:$0xff]
        %v232 = vld [vmem:[%s226 + $0x18] sm:$0xff]
        %v233 = vld [vmem:[%s226 + $0x20] sm:$0xff]
        %v234 = vld [vmem:[%s226 + $0x28] sm:$0xff]
        %v235 = vld [vmem:[%s226 + $0x30] sm:$0xff]
        %v236 = vld [vmem:[%s226 + $0x38] sm:$0xff]
        %v237 = vld [vmem:[%s226 + $0x40] sm:$0xff]
        %v238 = vld [vmem:[%s226 + $0x48] sm:$0xff]
        %v239 = vld [vmem:[%s226 + $0x50] sm:$0xff]
        %v240 = vld [vmem:[%s226 + $0x58] sm:$0xff]
        %v241 = vld [vmem:[%s226 + $0x60] sm:$0xff]
        %v242 = vld [vmem:[%s226 + $0x68] sm:$0xff]
        %v243 = vld [vmem:[%s226 + $0x70] sm:$0xff]
        %v244 = vld [vmem:[%s226 + $0x78] sm:$0xff]
        %v245 = vld [vmem:[%s226 + $0x80] sm:$0xff]
        %v246 = vld [vmem:[%s226 + $0x88] sm:$0xff]
        %v247 = vld [vmem:[%s226 + $0x90] sm:$0xff]
        %v248 = vld [vmem:[%s226 + $0x98] sm:$0xff]
        %v249 = vld [vmem:[%s226 + $0xa0] sm:$0xff]
        %v250 = vld [vmem:[%s226 + $0xa8] sm:$0xff]
        %v251 = vld [vmem:[%s226 + $0xb0] sm:$0xff]
        %v252 = vld [vmem:[%s226 + $0xb8] sm:$0xff]
        %v253 = vld [vmem:[%s226 + $0xc0] sm:$0xff]
        %v254 = vld [vmem:[%s226 + $0xc8] sm:$0xff]
        %v255 = vld [vmem:[%s226 + $0xd0] sm:$0xff]
        %v256 = vld [vmem:[%s226 + $0xd8] sm:$0xff]
        %v257 = vld [vmem:[%s226 + $0xe0] sm:$0xff]
        %v258 = vld [vmem:[%s226 + $0xe8] sm:$0xff]
        %v259 = vld [vmem:[%s226 + $0xf0] sm:$0xff]
        %v260 = vld [vmem:[%s226 + $0xf8] sm:$0xff]
        %v261 = vld [vmem:[%s1] sm:$0xff]
        %v262 = vld [vmem:[%s1 + $0x8] sm:$0xff]
        %v263 = vld [vmem:[%s1 + $0x10] sm:$0xff]
        %v264 = vld [vmem:[%s1 + $0x18] sm:$0xff]
        %v265 = vld [vmem:[%s1 + $0x20] sm:$0xff]
        %v266 = vld [vmem:[%s1 + $0x28] sm:$0xff]
        %v267 = vld [vmem:[%s1 + $0x30] sm:$0xff]
        %v268 = vld [vmem:[%s1 + $0x38] sm:$0xff]
        %v269 = vld [vmem:[%s1 + $0x40] sm:$0xff]
        %v270 = vld [vmem:[%s1 + $0x48] sm:$0xff]
        %v271 = vld [vmem:[%s1 + $0x50] sm:$0xff]
        %v272 = vld [vmem:[%s1 + $0x58] sm:$0xff]
        %v273 = vld [vmem:[%s1 + $0x60] sm:$0xff]
        %v274 = vld [vmem:[%s1 + $0x68] sm:$0xff]
        %v275 = vld [vmem:[%s1 + $0x70] sm:$0xff]
        %v276 = vld [vmem:[%s1 + $0x78] sm:$0xff]
        %v277 = vld [vmem:[%s1 + $0x80] sm:$0xff]
        %v278 = vld [vmem:[%s1 + $0x88] sm:$0xff]
        %v279 = vld [vmem:[%s1 + $0x90] sm:$0xf]
        %v280 = vld [vmem:[%s2] sm:$0x1]
        %v282 = vperm.slane %v280, 0
        %vm284 = vcmask 162816
        %v286 = vsel %vm284, %v230, 0
        %v289 = vsel %vm284, %v232, 0
        %v292 = vsel %vm284, %v234, 0
        %v295 = vsel %vm284, %v236, 0
        %v298 = vsel %vm284, %v238, 0
        %v301 = vsel %vm284, %v240, 0
        %v304 = vsel %vm284, %v242, 0
        %v307 = vsel %vm284, %v244, 0
        %v310 = vsel %vm284, %v246, 0
        %v313 = vsel %vm284, %v248, 0
        %v316 = vsel %vm284, %v250, 0
        %v319 = vsel %vm284, %v252, 0
        %v322 = vsel %vm284, %v254, 0
        %v325 = vsel %vm284, %v256, 0
        %v328 = vsel %vm284, %v258, 0
        %v331 = vsel %vm284, %v260, 0
        %vm333 = vcmask 1043456
        %v335 = vsel %vm333, %v279, 0
        %337 = vmatpush.msra.mxu0 %v276
        %338 = vmatpush.msra.mxu0 %v275
        %339 = vmatpush.msra.mxu0 %v274
        %340 = vmatpush.msra.mxu0 %v273
        %341 = vmatpush.msra.mxu0 %v272
        %342 = vmatpush.msra.mxu0 %v271
        %343 = vmatpush.msra.mxu0 %v270
        %344 = vmatpush.msra.mxu0 %v269
        %345 = vmatpush.msra.mxu0 %v268
        %346 = vmatpush.msra.mxu0 %v267
        %347 = vmatpush.msra.mxu0 %v266
        %348 = vmatpush.msra.mxu0 %v265
        %349 = vmatpush.msra.mxu0 %v264
        %350 = vmatpush.msra.mxu0 %v263
        %351 = vmatpush.msra.mxu0 %v262
        %352 = vmatpush.msra.mxu0 %v261
        %353 = vmatmul.f32.gmra.mxu0 %v229
        %v354 = vpop.f32.mrf.mxu0
        %v355 = vadd.f32 %v282, %v354
        %356 = vmatmul.f32.gmra.mxu0 %v231
        %v357 = vpop.f32.mrf.mxu0
        %v358 = vadd.f32 %v282, %v357
        %359 = vmatmul.f32.gmra.mxu0 %v233
        %v360 = vpop.f32.mrf.mxu0
        %v361 = vadd.f32 %v282, %v360
        %362 = vmatmul.f32.gmra.mxu0 %v235
        %v363 = vpop.f32.mrf.mxu0
        %v364 = vadd.f32 %v282, %v363
        %365 = vmatmul.f32.gmra.mxu0 %v237
        %v366 = vpop.f32.mrf.mxu0
        %v367 = vadd.f32 %v282, %v366
        %368 = vmatmul.f32.gmra.mxu0 %v239
        %v369 = vpop.f32.mrf.mxu0
        %v370 = vadd.f32 %v282, %v369
        %371 = vmatmul.f32.gmra.mxu0 %v241
        %v372 = vpop.f32.mrf.mxu0
        %v373 = vadd.f32 %v282, %v372
        %374 = vmatmul.f32.gmra.mxu0 %v243
        %v375 = vpop.f32.mrf.mxu0
        %v376 = vadd.f32 %v282, %v375
        %377 = vmatmul.f32.gmra.mxu0 %v245
        %v378 = vpop.f32.mrf.mxu0
        %v379 = vadd.f32 %v282, %v378
        %380 = vmatmul.f32.gmra.mxu0 %v247
        %v381 = vpop.f32.mrf.mxu0
        %v382 = vadd.f32 %v282, %v381
        %383 = vmatmul.f32.gmra.mxu0 %v249
        %v384 = vpop.f32.mrf.mxu0
        %v385 = vadd.f32 %v282, %v384
        %386 = vmatmul.f32.gmra.mxu0 %v251
        %v387 = vpop.f32.mrf.mxu0
        %v388 = vadd.f32 %v282, %v387
        %389 = vmatmul.f32.gmra.mxu0 %v253
        %v390 = vpop.f32.mrf.mxu0
        %v391 = vadd.f32 %v282, %v390
        %392 = vmatmul.f32.gmra.mxu0 %v255
        %v393 = vpop.f32.mrf.mxu0
        %v394 = vadd.f32 %v282, %v393
        %395 = vmatmul.f32.gmra.mxu0 %v257
        %v396 = vpop.f32.mrf.mxu0
        %v397 = vadd.f32 %v282, %v396
        %398 = vmatmul.f32.gmra.mxu0 %v259
        %v399 = vpop.f32.mrf.mxu0
        %v400 = vadd.f32 %v282, %v399
        %401 = vdwg.mxu0
        %402 = vmatpush.msra.mxu0 0.0
        %403 = vmatpush.msra.mxu0 0.0
        %404 = vmatpush.msra.mxu0 0.0
        %405 = vmatpush.msra.mxu0 0.0
        %406 = vmatpush.msra.mxu0 0.0
        %407 = vmatpush.msra.mxu0 0.0
        %408 = vmatpush.msra.mxu0 0.0
        %409 = vmatpush.msra.mxu0 0.0
        %410 = vmatpush.msra.mxu0 0.0
        %411 = vmatpush.msra.mxu0 0.0
        %412 = vmatpush.msra.mxu0 0.0
        %413 = vmatpush.msra.mxu0 0.0
        %414 = vmatpush.msra.mxu0 0.0
        %415 = vmatpush.msra.mxu0 %v335
        %416 = vmatpush.msra.mxu0 %v278
        %417 = vmatpush.msra.mxu0 %v277
        %418 = vmatmul.f32.gmra.mxu0 %v286
        %v419 = vpop.f32.mrf.mxu0
        %v420 = vadd.f32 %v355, %v419
        %421 = vmatmul.f32.gmra.mxu0 %v289
        %v422 = vpop.f32.mrf.mxu0
        %v423 = vadd.f32 %v358, %v422
        %424 = vmatmul.f32.gmra.mxu0 %v292
        %v425 = vpop.f32.mrf.mxu0
        %v426 = vadd.f32 %v361, %v425
        %427 = vmatmul.f32.gmra.mxu0 %v295
        %v428 = vpop.f32.mrf.mxu0
        %v429 = vadd.f32 %v364, %v428
        %430 = vmatmul.f32.gmra.mxu0 %v298
        %v431 = vpop.f32.mrf.mxu0
        %v432 = vadd.f32 %v367, %v431
        %433 = vmatmul.f32.gmra.mxu0 %v301
        %v434 = vpop.f32.mrf.mxu0
        %v435 = vadd.f32 %v370, %v434
        %436 = vmatmul.f32.gmra.mxu0 %v304
        %v437 = vpop.f32.mrf.mxu0
        %v438 = vadd.f32 %v373, %v437
        %439 = vmatmul.f32.gmra.mxu0 %v307
        %v440 = vpop.f32.mrf.mxu0
        %v441 = vadd.f32 %v376, %v440
        %442 = vmatmul.f32.gmra.mxu0 %v310
        %v443 = vpop.f32.mrf.mxu0
        %v444 = vadd.f32 %v379, %v443
        %445 = vmatmul.f32.gmra.mxu0 %v313
        %v446 = vpop.f32.mrf.mxu0
        %v447 = vadd.f32 %v382, %v446
        %448 = vmatmul.f32.gmra.mxu0 %v316
        %v449 = vpop.f32.mrf.mxu0
        %v450 = vadd.f32 %v385, %v449
        %451 = vmatmul.f32.gmra.mxu0 %v319
        %v452 = vpop.f32.mrf.mxu0
        %v453 = vadd.f32 %v388, %v452
        %454 = vmatmul.f32.gmra.mxu0 %v322
        %v455 = vpop.f32.mrf.mxu0
        %v456 = vadd.f32 %v391, %v455
        %457 = vmatmul.f32.gmra.mxu0 %v325
        %v458 = vpop.f32.mrf.mxu0
        %v459 = vadd.f32 %v394, %v458
        %460 = vmatmul.f32.gmra.mxu0 %v328
        %v461 = vpop.f32.mrf.mxu0
        %v462 = vadd.f32 %v397, %v461
        %463 = vmatmul.f32.gmra.mxu0 %v331
        %v464 = vpop.f32.mrf.mxu0
        %v465 = vadd.f32 %v400, %v464
        %466 = vdwg.mxu0
        %v467 = vmax.f32 %v420, 0.0
        %v468 = vmax.f32 %v423, 0.0
        %v469 = vmax.f32 %v426, 0.0
        %v470 = vmax.f32 %v429, 0.0
        %v471 = vmax.f32 %v432, 0.0
        %v472 = vmax.f32 %v435, 0.0
        %v473 = vmax.f32 %v438, 0.0
        %v474 = vmax.f32 %v441, 0.0
        %v475 = vmax.f32 %v444, 0.0
        %v476 = vmax.f32 %v447, 0.0
        %v477 = vmax.f32 %v450, 0.0
        %v478 = vmax.f32 %v453, 0.0
        %v479 = vmax.f32 %v456, 0.0
        %v480 = vmax.f32 %v459, 0.0
        %v481 = vmax.f32 %v462, 0.0
        %v482 = vmax.f32 %v465, 0.0
        %v483 = vld [vmem:[%s3] sm:$0xff]
        %v484 = vld [vmem:[%s3 + $0x8] sm:$0xff]
        %v485 = vld [vmem:[%s3 + $0x10] sm:$0xff]
        %v486 = vld [vmem:[%s3 + $0x18] sm:$0xff]
        %v487 = vld [vmem:[%s4] sm:$0x1]
        %v489 = vperm.slane %v487, 0
        %vm491 = vcmask 261120
        %v493 = vsel %vm491, %v467, 0
        %v496 = vsel %vm491, %v468, 0
        %v499 = vsel %vm491, %v469, 0
        %v502 = vsel %vm491, %v470, 0
        %v505 = vsel %vm491, %v471, 0
        %v508 = vsel %vm491, %v472, 0
        %v511 = vsel %vm491, %v473, 0
        %v514 = vsel %vm491, %v474, 0
        %v517 = vsel %vm491, %v475, 0
        %v520 = vsel %vm491, %v476, 0
        %v523 = vsel %vm491, %v477, 0
        %v526 = vsel %vm491, %v478, 0
        %v529 = vsel %vm491, %v479, 0
        %v532 = vsel %vm491, %v480, 0
        %v535 = vsel %vm491, %v481, 0
        %v538 = vsel %vm491, %v482, 0
        %540 = vmatpush.msra.mxu0 0.0
        %541 = vmatpush.msra.mxu0 0.0
        %542 = vmatpush.msra.mxu0 0.0
        %543 = vmatpush.msra.mxu0 0.0
        %544 = vmatpush.msra.mxu0 0.0
        %545 = vmatpush.msra.mxu0 0.0
        %546 = vmatpush.msra.mxu0 0.0
        %547 = vmatpush.msra.mxu0 0.0
        %548 = vmatpush.msra.mxu0 0.0
        %549 = vmatpush.msra.mxu0 0.0
        %550 = vmatpush.msra.mxu0 0.0
        %551 = vmatpush.msra.mxu0 0.0
        %552 = vmatpush.msra.mxu0 %v486
        %553 = vmatpush.msra.mxu0 %v485
        %554 = vmatpush.msra.mxu0 %v484
        %555 = vmatpush.msra.mxu0 %v483
        %556 = vmatmul.f32.gmra.mxu0 %v493
        %v557 = vpop.f32.mrf.mxu0
        %v558 = vadd.f32 %v489, %v557
        %559 = vmatmul.f32.gmra.mxu0 %v496
        %v560 = vpop.f32.mrf.mxu0
        %v561 = vadd.f32 %v489, %v560
        %562 = vmatmul.f32.gmra.mxu0 %v499
        %v563 = vpop.f32.mrf.mxu0
        %v564 = vadd.f32 %v489, %v563
        %565 = vmatmul.f32.gmra.mxu0 %v502
        %v566 = vpop.f32.mrf.mxu0
        %v567 = vadd.f32 %v489, %v566
        %568 = vmatmul.f32.gmra.mxu0 %v505
        %v569 = vpop.f32.mrf.mxu0
        %v570 = vadd.f32 %v489, %v569
        %571 = vmatmul.f32.gmra.mxu0 %v508
        %v572 = vpop.f32.mrf.mxu0
        %v573 = vadd.f32 %v489, %v572
        %574 = vmatmul.f32.gmra.mxu0 %v511
        %v575 = vpop.f32.mrf.mxu0
        %v576 = vadd.f32 %v489, %v575
        %577 = vmatmul.f32.gmra.mxu0 %v514
        %v578 = vpop.f32.mrf.mxu0
        %v579 = vadd.f32 %v489, %v578
        %580 = vmatmul.f32.gmra.mxu0 %v517
        %v581 = vpop.f32.mrf.mxu0
        %v582 = vadd.f32 %v489, %v581
        %583 = vmatmul.f32.gmra.mxu0 %v520
        %v584 = vpop.f32.mrf.mxu0
        %v585 = vadd.f32 %v489, %v584
        %586 = vmatmul.f32.gmra.mxu0 %v523
        %v587 = vpop.f32.mrf.mxu0
        %v588 = vadd.f32 %v489, %v587
        %589 = vmatmul.f32.gmra.mxu0 %v526
        %v590 = vpop.f32.mrf.mxu0
        %v591 = vadd.f32 %v489, %v590
        %592 = vmatmul.f32.gmra.mxu0 %v529
        %v593 = vpop.f32.mrf.mxu0
        %v594 = vadd.f32 %v489, %v593
        %595 = vmatmul.f32.gmra.mxu0 %v532
        %v596 = vpop.f32.mrf.mxu0
        %v597 = vadd.f32 %v489, %v596
        %598 = vmatmul.f32.gmra.mxu0 %v535
        %v599 = vpop.f32.mrf.mxu0
        %v600 = vadd.f32 %v489, %v599
        %601 = vmatmul.f32.gmra.mxu0 %v538
        %v602 = vpop.f32.mrf.mxu0
        %v603 = vadd.f32 %v489, %v602
        %604 = vdwg.mxu0
        %605 = vst [vmem:[%s220] sm:$0xff] %v558
        %606 = vst [vmem:[%s220 + $0x8] sm:$0xff] %v561
        %607 = vst [vmem:[%s220 + $0x10] sm:$0xff] %v564
        %608 = vst [vmem:[%s220 + $0x18] sm:$0xff] %v567
        %609 = vst [vmem:[%s220 + $0x20] sm:$0xff] %v570
        %610 = vst [vmem:[%s220 + $0x28] sm:$0xff] %v573
        %611 = vst [vmem:[%s220 + $0x30] sm:$0xff] %v576
        %612 = vst [vmem:[%s220 + $0x38] sm:$0xff] %v579
        %613 = vst [vmem:[%s220 + $0x40] sm:$0xff] %v582
        %614 = vst [vmem:[%s220 + $0x48] sm:$0xff] %v585
        %615 = vst [vmem:[%s220 + $0x50] sm:$0xff] %v588
        %616 = vst [vmem:[%s220 + $0x58] sm:$0xff] %v591
        %617 = vst [vmem:[%s220 + $0x60] sm:$0xff] %v594
        %618 = vst [vmem:[%s220 + $0x68] sm:$0xff] %v597
        %619 = vst [vmem:[%s220 + $0x70] sm:$0xff] %v600
        %620 = vst [vmem:[%s220 + $0x78] sm:$0xff] %v603
        %s621 = sand.u32 %s137, 1
        %s622 = scalar_lea.sflag [#allocation3], %s621
        %s623 = sand.u32 %s137, 1
        %s624 = smul.addr %s623, 128
        %s625 = scalar_lea.vmem [#allocation2], %s624
        // Predicated region
        $region41: #{tpu_custom_call.1} parent=39 // pred_check
          %p626 = pneg %p147
        $region42: #{tpu_custom_call.1} parent=39 // pred_check_branch
          %628 = sbr.rel (%p626) target = $region44
        $region43: #{tpu_custom_call.1} parent=39 // pred_region
          %s629 = smul.u32 16, %s19
          %631 = vsyncadd %s622, 0
          %s632 = smul.addr %s629, 8
          %s633 = scalar_lea.hbm %s5, %s632
          %s634 = sshll.u32 %s625, 4
          %s635 = int_to_ptr.vmem [resolvable:$true] %s634
          %s636 = sshll.u32 %s633, 4
          %s637 = int_to_ptr.hbm [resolvable:$true] %s636
          %642 = dma.vmem_to_hbm [thread:$0]  %s635, 2048, %s637, %s622, 128, 128, 8
        $region44: #{tpu_custom_call.1} parent=39 // pred_fallthru
          _
      $region40: #{tpu_custom_call.1} parent=5 // pred_fallthru
        _
      %p643 = scmp.le.s32.totalorder 2, %s14
      // Predicated region
      $region45: #{tpu_custom_call.1} parent=5 // pred_check
        %p644 = pneg %p643
      $region46: #{tpu_custom_call.1} parent=5 // pred_check_branch
        %646 = sbr.rel (%p644) target = $region48
      $region47: #{tpu_custom_call.1} parent=5 // pred_region
        %s647 = ssub.s32 %s14, 2
        // Predicated region
        $region49: #{tpu_custom_call.1} parent=47 // pred_check
          %p648 = pneg %p153
        $region50: #{tpu_custom_call.1} parent=47 // pred_check_branch
          %650 = sbr.rel (%p648) target = $region52
        $region51: #{tpu_custom_call.1} parent=47 // pred_region
          %s651 = sand.u32 %s138, 1
          %s652 = scalar_lea.sflag [#allocation3], %s651
          %s653 = sand.u32 %s138, 1
          %s654 = smul.addr %s653, 128
          %s655 = scalar_lea.vmem [#allocation2], %s654
          %657 = dma.done %s652, 2048
        $region52: #{tpu_custom_call.1} parent=47 // pred_fallthru
          _
      $region48: #{tpu_custom_call.1} parent=5 // pred_fallthru
        _
    $region6: #{tpu_custom_call.1} parent=1 // loop_footer
      %s18 = sadd.s32 1, %s14
    $region7: #{tpu_custom_call.1} parent=1 // loop_footer_branch
      %13 = sbr.rel target = $region3
    $region8: #{tpu_custom_call.1} parent=1 // loop_exit
      _
    %658 = vsyncpa [#allocation3], 1
    %s659 = scalar_lea.sflag [#allocation3], 1
    %660 = vsyncpa %s659, 1

</llo_original>
